<compile_context>
chip_gen: v5e
topology: v5e:2x2
jax: 0.10.0
libtpu: 0.0.40
codegen_flags: <defaults>
</compile_context>

<pallas_src>
import jax
import jax.numpy as jnp
from jax.experimental import pallas as pl
from jax.experimental.pallas import tpu as pltpu

N_TASKS = 4
_LANES = 128


def _cdiv(a, b):
    return -(-a // b)


def _round_up(x, m):
    return ((x + m - 1) // m) * m


def _sse_kernel(p_ref, t_ref, sse_ref):
    """Streaming sum-of-squared-errors.

    p_ref/t_ref : (block_rows, 128) tile of the flattened (N, 4) arrays.
    sse_ref     : (8, 128) output block, revisited across the reduction axis
                  (grid axis 1) -> acts as the accumulator.  Task of lane l is
                  l % 4; the per-task reduction is finished in the wrapper.
    """
    j = pl.program_id(1)

    @pl.when(j == 0)
    def _():
        sse_ref[...] = jnp.zeros_like(sse_ref)

    d = p_ref[...] - t_ref[...]                                   # (BR, 128)
    # Fold BR rows onto 8 sublanes: pure vreg adds, no cross-lane traffic.
    sse_ref[...] += jnp.sum((d * d).reshape(-1, 8, _LANES), axis=0)


def multi_task_loss(preds, targets, log_vars, is_regression, *,
                    block_rows=2048, num_splits=2):
    """preds/targets: (N, 4). Returns the scalar multi-task loss (reduction='mean')."""
    n, t = preds.shape
    assert t == N_TASKS
    total = n * t

    # ---- choose tiling (all Python ints, trace-time) ----------------------
    rows_min = _cdiv(total, _LANES)
    num_splits = int(max(1, min(num_splits, rows_min // 8)))       # per-core split (v7x)
    rows_per_split = _cdiv(rows_min, num_splits)
    steps = _cdiv(rows_per_split, block_rows)                      # grid steps per split
    br = _round_up(_cdiv(rows_per_split, steps), 8)                # block rows (mult. of 8)
    rows_padded = num_splits * steps * br
    total_padded = rows_padded * _LANES

    # ---- transpose-free, lane-dense layout: (N,4) -> flat -> (rows, 128) --
    def to_lane_slab(x):
        flat = jnp.asarray(x, jnp.float32).reshape(-1)             # row-major, free
        flat = jnp.pad(flat, (0, total_padded - total))            # zeros -> SSE += 0
        return flat.reshape(rows_padded, _LANES)

    p_slab = to_lane_slab(preds)
    t_slab = to_lane_slab(targets)

    sse = pl.pallas_call(
        _sse_kernel,
        out_shape=jax.ShapeDtypeStruct((num_splits * 8, _LANES), jnp.float32),
        grid_spec=pltpu.PrefetchScalarGridSpec(
            num_scalar_prefetch=0,
            grid=(num_splits, steps),
            in_specs=[
                pl.BlockSpec((br, _LANES), lambda c, j: (c * steps + j, 0)),
                pl.BlockSpec((br, _LANES), lambda c, j: (c * steps + j, 0)),
            ],
            # One (8, 128) slab per split; constant in j -> resident accumulator.
            out_specs=pl.BlockSpec((8, _LANES), lambda c, j: (c, 0)),
        ),
        compiler_params=pltpu.CompilerParams(
            dimension_semantics=("parallel", "arbitrary"),
        ),
    )(p_slab, t_slab)

    # ---- tiny epilogue (O(1) work), mirrors the PyTorch module ------------
    # lane l holds task l % 4 for every row / split.
    sse_lane = jnp.sum(sse, axis=0)                                # (128,)
    sse_task = sse_lane.reshape(-1, N_TASKS).sum(axis=0)           # (4,) per-task SSE
    losses = sse_task / jnp.float32(n)                             # per-task MSE (mean)

    lv = jnp.asarray(log_vars, jnp.float32)
    reg = jnp.asarray(is_regression, jnp.float32)
    # coeffs = 1/((r+1)*stds^2) with stds = sqrt(exp(lv));  log(stds) = 0.5*lv
    coeffs = jnp.exp(-lv) / (reg + 1.0)
    mtl = coeffs * losses + 0.5 * lv
    return jnp.mean(mtl)                                           # reduction='mean'
    # TODO(synk): loss_fn is a runtime callable in PyTorch; fixed here to MSE(mean).


def _reference(preds, targets, log_vars, is_regression):
    """Pure-JAX reference mirroring the PyTorch module literally (F.mse_loss)."""
    stds = jnp.exp(log_vars) ** 0.5
    coeffs = 1.0 / ((is_regression + 1.0) * stds ** 2)
    losses = jnp.stack([jnp.mean((preds[:, i] - targets[:, i]) ** 2)
                        for i in range(N_TASKS)])
    return jnp.mean(coeffs * losses + jnp.log(stds))


if __name__ == "__main__":
    key = jax.random.PRNGKey(0)
    kp, kt = jax.random.split(key)

    # Small shape; deliberately NOT a multiple of 32 samples to exercise padding.
    n = 200
    preds = jax.random.normal(kp, (n, N_TASKS), dtype=jnp.float32)
    targets = jax.random.normal(kt, (n, N_TASKS), dtype=jnp.float32)

    # Parameters as in __init__: log_vars = zeros, all tasks regression.
    log_vars = jnp.zeros((N_TASKS,), dtype=jnp.float32)
    is_regression = jnp.ones((N_TASKS,), dtype=jnp.float32)

    out = jax.block_until_ready(multi_task_loss(preds, targets, log_vars, is_regression))
    ref = _reference(preds, targets, log_vars, is_regression)
    assert jnp.allclose(out, ref, rtol=1e-5, atol=1e-5), (out, ref)

    # Second check: non-zero log_vars, forced multi-step + 2-split grid path.
    kp2, kt2 = jax.random.split(jax.random.PRNGKey(1))
    n2 = 1000
    preds2 = jax.random.normal(kp2, (n2, N_TASKS), dtype=jnp.float32)
    targets2 = jax.random.normal(kt2, (n2, N_TASKS), dtype=jnp.float32)
    log_vars2 = jnp.array([0.3, -0.7, 1.1, 0.0], dtype=jnp.float32)
    out2 = jax.block_until_ready(
        multi_task_loss(preds2, targets2, log_vars2, is_regression,
                        block_rows=8, num_splits=2))
    ref2 = _reference(preds2, targets2, log_vars2, is_regression)
    assert jnp.allclose(out2, ref2, rtol=1e-5, atol=1e-5), (out2, ref2)

    print("KERNEL_OK")
</pallas_src>

<mosaic_0001>
module attributes {stable_mosaic.version = 11 : i64} {
  func.func @_sse_kernel(%arg0: i32, %arg1: i32, %arg2: memref<8x128xf32, #tpu.memory_space<vmem>>, %arg3: memref<8x128xf32, #tpu.memory_space<vmem>>, %arg4: memref<8x128xf32, #tpu.memory_space<vmem>>) attributes {dimension_semantics = [#tpu.dimension_semantics<parallel>, #tpu.dimension_semantics<arbitrary>], iteration_bounds = array<i64: 1, 1>, scalar_prefetch = 0 : i64, scratch_operands = 0 : i64, tpu.core_type = #tpu.core_type<tc>, window_params = [{transform_indices = @transform_0, window_bounds = array<i64: 8, 128>}, {transform_indices = @transform_1, window_bounds = array<i64: 8, 128>}, {transform_indices = @transform_2, window_bounds = array<i64: 8, 128>}]} {
    %c0_i32 = arith.constant 0 : i32
    %0 = arith.cmpi eq, %arg1, %c0_i32 : i32
    %1 = arith.extui %0 : i1 to i32
    %c0_i32_0 = arith.constant 0 : i32
    %2 = arith.cmpi ne, %1, %c0_i32_0 : i32
    scf.if %2 {
      %cst_8 = arith.constant 0.000000e+00 : f32
      %12 = vector.broadcast %cst_8 : f32 to vector<8x128xf32>
      %c0_9 = arith.constant 0 : index
      %c0_10 = arith.constant 0 : index
      %13 = vector.load %arg4[%c0_9, %c0_10] : memref<8x128xf32, #tpu.memory_space<vmem>>, vector<8x128xf32>
      tpu.vector_store %arg4[%c0_9, %c0_10], %12 {strides = array<i32>} : memref<8x128xf32, #tpu.memory_space<vmem>>, vector<8x128xf32>,
    } else {
    }
    %c0 = arith.constant 0 : index
    %c0_1 = arith.constant 0 : index
    %3 = vector.load %arg2[%c0, %c0_1] : memref<8x128xf32, #tpu.memory_space<vmem>>, vector<8x128xf32>
    %c0_2 = arith.constant 0 : index
    %c0_3 = arith.constant 0 : index
    %4 = vector.load %arg3[%c0_2, %c0_3] : memref<8x128xf32, #tpu.memory_space<vmem>>, vector<8x128xf32>
    %5 = arith.subf %3, %4 : vector<8x128xf32>
    %c0_4 = arith.constant 0 : index
    %c0_5 = arith.constant 0 : index
    %6 = vector.load %arg4[%c0_4, %c0_5] : memref<8x128xf32, #tpu.memory_space<vmem>>, vector<8x128xf32>
    %7 = arith.mulf %5, %5 : vector<8x128xf32>
    %8 = vector.shape_cast %7 : vector<8x128xf32> to vector<1x8x128xf32>
    %cst = arith.constant dense<0.000000e+00> : vector<8x128xf32>
    %9 = vector.multi_reduction <add>, %8, %cst [0] : vector<1x8x128xf32> to vector<8x128xf32>
    %10 = arith.addf %6, %9 : vector<8x128xf32>
    %c0_6 = arith.constant 0 : index
    %c0_7 = arith.constant 0 : index
    %11 = vector.load %arg4[%c0_6, %c0_7] : memref<8x128xf32, #tpu.memory_space<vmem>>, vector<8x128xf32>
    tpu.vector_store %arg4[%c0_6, %c0_7], %10 {strides = array<i32>} : memref<8x128xf32, #tpu.memory_space<vmem>>, vector<8x128xf32>,
    return
  }
  func.func @transform_0(%arg0: i32, %arg1: i32) -> (i32, i32) {
    %c1_i32 = arith.constant 1 : i32
    %0 = arith.muli %arg0, %c1_i32 : i32
    %1 = arith.addi %0, %arg1 : i32
    %c0_i32 = arith.constant 0 : i32
    %c0_i32_0 = arith.constant 0 : i32
    return %1, %c0_i32 : i32, i32
  }
  func.func @transform_1(%arg0: i32, %arg1: i32) -> (i32, i32) {
    %c1_i32 = arith.constant 1 : i32
    %0 = arith.muli %arg0, %c1_i32 : i32
    %1 = arith.addi %0, %arg1 : i32
    %c0_i32 = arith.constant 0 : i32
    %c0_i32_0 = arith.constant 0 : i32
    return %1, %c0_i32 : i32, i32
  }
  func.func @transform_2(%arg0: i32, %arg1: i32) -> (i32, i32) {
    %c0_i32 = arith.constant 0 : i32
    %c0_i32_0 = arith.constant 0 : i32
    return %arg0, %c0_i32 : i32, i32
  }
}

</mosaic_0001>

<llo_original>
// kernel: tpu_custom_call.1
$region0: #{tpu_custom_call.1}
  #allocation0 [shape = 'u32[]', space=smem, size = 0x4, offset = 0x4, fixed_abs, tag = 'smem constant byte address 0x4 - core index']
  #allocation1 [shape = 'u32[72,128]{1,0:T(1,128)}', space=vmem, size = 0x9000, scoped, tag = 'internal scratch']
  %s0 = inlined_call_operand.hbm [shape: f32[8,128], index: 0, kind: input, shape index: {}]
  %s1 = inlined_call_operand.hbm [shape: f32[8,128], index: 1, kind: input, shape index: {}]
  %s2 = inlined_call_operand.hbm [shape: f32[8,128], index: 2, kind: output, shape index: {}]
  %s3 = sld [smem:[#allocation0]]
  $region30: #{tpu_custom_call.1} parent=0
    _
  %s5 = ssub.s32 1, %s3
  %s6 = scalar_select 0, %s5, %s3
  $region1: #{tpu_custom_call.1} parent=0
    #allocation2 [shape = 'u8[4096]{0}', space=vmem, size = 0x1000, scoped, tag = 'input window, operand 0, single buffered']
    #allocation3 [shape = 's32[1]{0}', space=sflag, size = 0x4, scoped, tag = 'scoped memory for tpu_custom_call.1']
    #allocation4 [shape = 's32[1]{0}', space=sflag, size = 0x4, scoped, tag = 'scoped memory for tpu_custom_call.1']
    #allocation5 [shape = 'u8[4096]{0}', space=vmem, size = 0x1000, scoped, tag = 'input window, operand 1, single buffered']
    #allocation6 [shape = 's32[1]{0}', space=sflag, size = 0x4, scoped, tag = 'scoped memory for tpu_custom_call.1']
    #allocation7 [shape = 'u8[4096]{0}', space=vmem, size = 0x1000, scoped, tag = 'output window, operand 0, single buffered']
    %7 = vsyncpa [#allocation3], 0
    %8 = vsyncpa [#allocation6], 0
    %9 = vsyncpa [#allocation4], 0
    // Predicated region
    $region2: #{tpu_custom_call.1} parent=1 // pred_check
      _
    $region3: #{tpu_custom_call.1} parent=1 // pred_check_branch
      %11 = sbr.rel (0) target = $region5
    $region4: #{tpu_custom_call.1} parent=1 // pred_region
      %s12 = sadd.s32 0, 0
      %14 = vsyncadd [#allocation3], 0
      %s15 = smul.addr %s12, 8
      %s16 = scalar_lea.hbm %s0, %s15
      %s18 = sshll.u32 %s16, 4
      %s19 = int_to_ptr.hbm [resolvable:$true] %s18
      %s20 = sshll.u32 [#allocation2], 4
      %s21 = int_to_ptr.vmem [resolvable:$true] %s20
      %23 = dma.hbm_to_vmem [thread:$0]  %s19, 128, %s21, [#allocation3]
    $region5: #{tpu_custom_call.1} parent=1 // pred_fallthru
      _
    // Predicated region
    $region6: #{tpu_custom_call.1} parent=1 // pred_check
      _
    $region7: #{tpu_custom_call.1} parent=1 // pred_check_branch
      %25 = sbr.rel (0) target = $region9
    $region8: #{tpu_custom_call.1} parent=1 // pred_region
      %s26 = sadd.s32 0, 0
      %28 = vsyncadd [#allocation6], 0
      %s29 = smul.addr %s26, 8
      %s30 = scalar_lea.hbm %s1, %s29
      %s32 = sshll.u32 %s30, 4
      %s33 = int_to_ptr.hbm [resolvable:$true] %s32
      %s34 = sshll.u32 [#allocation5], 4
      %s35 = int_to_ptr.vmem [resolvable:$true] %s34
      %37 = dma.hbm_to_vmem [thread:$0]  %s33, 128, %s35, [#allocation6]
    $region9: #{tpu_custom_call.1} parent=1 // pred_fallthru
      _
    // Predicated region
    $region10: #{tpu_custom_call.1} parent=1 // pred_check
      _
    $region11: #{tpu_custom_call.1} parent=1 // pred_check_branch
      %39 = sbr.rel (0) target = $region13
    $region12: #{tpu_custom_call.1} parent=1 // pred_region
      %41 = dma.done [#allocation3], 128
    $region13: #{tpu_custom_call.1} parent=1 // pred_fallthru
      _
    // Predicated region
    $region14: #{tpu_custom_call.1} parent=1 // pred_check
      _
    $region15: #{tpu_custom_call.1} parent=1 // pred_check_branch
      %43 = sbr.rel (0) target = $region17
    $region16: #{tpu_custom_call.1} parent=1 // pred_region
      %45 = dma.done [#allocation6], 128
    $region17: #{tpu_custom_call.1} parent=1 // pred_fallthru
      _
    %s46 = sadd.s32 0, 0
    %s47 = sadd.s32 0, 0
    %p48 = scmp.eq.s32.totalorder 0, 0
    // Predicated region
    $region18: #{tpu_custom_call.1} parent=1 // pred_check
      %p49 = pneg %p48
    $region19: #{tpu_custom_call.1} parent=1 // pred_check_branch
      %51 = sbr.rel (%p49) target = $region21
    $region20: #{tpu_custom_call.1} parent=1 // pred_region
      %52 = vst [vmem:[#allocation7] sm:$0xff] 0.0
    $region21: #{tpu_custom_call.1} parent=1 // pred_fallthru
      _
    %v53 = vld [vmem:[#allocation2] sm:$0xff]
    %v54 = vld [vmem:[#allocation5] sm:$0xff]
    %v55 = vsub.f32 %v53, %v54
    %v56 = vld [vmem:[#allocation7] sm:$0xff]
    %v57 = vmul.f32 %v55, %v55
    %v58 = vadd.f32 %v57, 0.0
    %v59 = vadd.f32 %v56, %v58
    %60 = vst [vmem:[#allocation7] sm:$0xff] %v59
    // Predicated region
    $region22: #{tpu_custom_call.1} parent=1 // pred_check
      _
    $region23: #{tpu_custom_call.1} parent=1 // pred_check_branch
      %62 = sbr.rel (0) target = $region25
    $region24: #{tpu_custom_call.1} parent=1 // pred_region
      %64 = vsyncadd [#allocation4], 0
      %s66 = sshll.u32 [#allocation7], 4
      %s67 = int_to_ptr.vmem [resolvable:$true] %s66
      %s68 = sshll.u32 %s2, 4
      %s69 = int_to_ptr.hbm [resolvable:$true] %s68
      %71 = dma.vmem_to_hbm [thread:$0]  %s67, 128, %s69, [#allocation4]
    $region25: #{tpu_custom_call.1} parent=1 // pred_fallthru
      _
    // Predicated region
    $region26: #{tpu_custom_call.1} parent=1 // pred_check
      _
    $region27: #{tpu_custom_call.1} parent=1 // pred_check_branch
      %73 = sbr.rel (0) target = $region29
    $region28: #{tpu_custom_call.1} parent=1 // pred_region
      %75 = dma.done [#allocation4], 128
    $region29: #{tpu_custom_call.1} parent=1 // pred_fallthru
      _
    %76 = vsyncpa [#allocation3], 1
    %77 = vsyncpa [#allocation6], 1
    %78 = vsyncpa [#allocation4], 1

</llo_original>
